<compile_context>
chip_gen: v7x
topology: tpu7x:2x2x1
jax: 0.10.0
libtpu: 0.0.40
codegen_flags: <defaults>
</compile_context>

<pallas_src>
import functools

import jax
import jax.numpy as jnp
from jax.experimental import pallas as pl
from jax.experimental.pallas import tpu as pltpu


def _round_up(x, m):
    return ((x + m - 1) // m) * m


def _vmem_cap_bytes():
    """Physical VMEM minus ~16 MiB compiler-scratch headroom (v7x-safe fallback)."""
    try:
        phys = int(pltpu.get_tpu_info().vmem_capacity_bytes)
    except Exception:
        phys = 64 << 20  # assume the smallest generation (v7x) if query fails
    return max(phys - (16 << 20), 16 << 20)


def _choose_batch_tile(batch, target=1024):
    """Pick a large batch tile (multiple of 16).

    A big tile amortizes the ~0.35 us per-grid-step pipeline overhead and fills
    the MXU's M dimension; keeping >= 2 grid steps lets the "parallel" grid
    axis shard across both v7x TensorCores (near-zero cost on v5e/v6e).
    Rounding to 16 keeps bf16 (16,128) sublane packing clean; free for f32.
    """
    b = _round_up(batch, 8)
    if b <= 16:
        return b
    steps = max(2, pl.cdiv(b, target))
    return _round_up(pl.cdiv(b, steps), 16)


def _disc_kernel(x_ref, w1_ref, b1_ref, w2_ref, b2_ref, w3_ref, b3_ref, o_ref):
    """Fused 3-layer MLP forward for one batch tile.

    All three matmuls (MXU), the LeakyReLU activations (VPU) and the final
    sigmoid (EUP exp) run in a single kernel invocation so intermediate
    activations never leave VMEM.  Dropout is identity (eval-mode semantics).
    """
    x = x_ref[...]

    # ---- layer 1: Linear + LeakyReLU(0.2) ----
    h = jnp.dot(x, w1_ref[...], preferred_element_type=jnp.float32) + b1_ref[...]
    h = jnp.where(h > 0, h, 0.2 * h)
    # dropout (eval mode) == identity

    # ---- layer 2: Linear + LeakyReLU(0.2) ----
    h = jnp.dot(h.astype(w2_ref.dtype), w2_ref[...],
                preferred_element_type=jnp.float32) + b2_ref[...]
    h = jnp.where(h > 0, h, 0.2 * h)
    # dropout (eval mode) == identity

    # ---- layer 3: Linear + sigmoid ----
    h = jnp.dot(h.astype(w3_ref.dtype), w3_ref[...],
                preferred_element_type=jnp.float32) + b3_ref[...]
    o_ref[...] = jax.nn.sigmoid(h).astype(o_ref.dtype)


@functools.partial(jax.jit, static_argnames=("batch_tile",))
def discriminator_forward(x, w1, b1, w2, b2, w3, b3, *, batch_tile=None):
    """x: [B, input_size] -> [B, output_size] float32 (sigmoid probs).

    For bf16 streaming, pass `x` already as bfloat16 (produced upstream, not
    cast right before this call); weights are then cast to bf16 here (tiny,
    resident) while MXU accumulation and the epilogue remain float32.
    """
    B, in_size = x.shape
    h1 = w1.shape[1]
    h2 = w2.shape[1]
    out_size = w3.shape[1]

    # ---------------- tiling ----------------
    tile = batch_tile if batch_tile is not None else _choose_batch_tile(B)
    grid = (pl.cdiv(B, tile),)  # ragged last block: OOB reads are discarded,
                                # OOB output rows are masked on writeback.

    if x.dtype == jnp.bfloat16:
        w1, w2, w3 = (w.astype(jnp.bfloat16) for w in (w1, w2, w3))

    # Biases as 2-D f32 rows so they broadcast against [tile, features] in-kernel.
    b1r = b1.reshape(1, h1).astype(jnp.float32)
    b2r = b2.reshape(1, h2).astype(jnp.float32)
    b3r = b3.reshape(1, out_size).astype(jnp.float32)

    xsize = jnp.dtype(x.dtype).itemsize
    wsize = jnp.dtype(w1.dtype).itemsize

    # VMEM accounting with internal (8,128) lane/sublane padding; inputs and
    # outputs are double-buffered by the pipeliner.
    lane = lambda n: _round_up(n, 128)
    sub = lambda n: _round_up(n, 8)
    weight_vmem = (sub(in_size) * lane(h1) + sub(h1) * lane(h2)
                   + sub(h2) * lane(out_size)) * wsize
    bias_vmem = 8 * (lane(h1) + lane(h2) + lane(out_size)) * 4
    io_vmem = tile * (lane(in_size) * xsize + lane(out_size) * 4)
    act_vmem = tile * (lane(h1) + lane(h2) + lane(out_size)) * 4
    need = 2 * (weight_vmem + bias_vmem + io_vmem) + act_vmem
    vmem_limit = int(min(max(2 * need, 16 << 20), _vmem_cap_bytes()))

    # True (unpadded) traffic / flop counts for the scheduler.
    weight_bytes = (in_size * h1 + h1 * h2 + h2 * out_size) * wsize
    cost = pl.CostEstimate(
        flops=2 * B * (in_size * h1 + h1 * h2 + h2 * out_size),
        transcendentals=B * out_size,
        bytes_accessed=(B * in_size * xsize + weight_bytes
                        + (h1 + h2 + out_size) * 4 + B * out_size * 4),
    )

    return pl.pallas_call(
        _disc_kernel,
        out_shape=jax.ShapeDtypeStruct((B, out_size), jnp.float32),
        grid_spec=pltpu.PrefetchScalarGridSpec(
            num_scalar_prefetch=0,
            grid=grid,
            in_specs=[
                # activations: tiled over batch, full feature dim
                pl.BlockSpec((tile, in_size), lambda i: (i, 0)),
                # weights / biases: whole array resident every step
                pl.BlockSpec((in_size, h1), lambda i: (0, 0)),
                pl.BlockSpec((1, h1), lambda i: (0, 0)),
                pl.BlockSpec((h1, h2), lambda i: (0, 0)),
                pl.BlockSpec((1, h2), lambda i: (0, 0)),
                pl.BlockSpec((h2, out_size), lambda i: (0, 0)),
                pl.BlockSpec((1, out_size), lambda i: (0, 0)),
            ],
            # Byte-dense HBM output: block spans the full (narrow) feature dim,
            # so the HBM side of the writeback DMA is contiguous.
            out_specs=pl.BlockSpec((tile, out_size), lambda i: (i, 0)),
        ),
        compiler_params=pltpu.CompilerParams(
            dimension_semantics=("parallel",),
            vmem_limit_bytes=vmem_limit,
        ),
        cost_estimate=cost,
    )(x, w1, b1r, w2, b2r, w3, b3r)


def init_params(key, input_size, hidden_size1, hidden_size2, output_size):
    """Deterministic nn.Linear-style init (uniform(-1/sqrt(fan_in), 1/sqrt(fan_in)))."""
    ks = jax.random.split(key, 6)

    def linear(kw, kb, fan_in, fan_out):
        bound = 1.0 / jnp.sqrt(jnp.float32(fan_in))
        # stored as [in, out] (transpose of PyTorch's [out, in])
        w = jax.random.uniform(kw, (fan_in, fan_out), jnp.float32, -bound, bound)
        b = jax.random.uniform(kb, (fan_out,), jnp.float32, -bound, bound)
        return w, b

    w1, b1 = linear(ks[0], ks[1], input_size, hidden_size1)
    w2, b2 = linear(ks[2], ks[3], hidden_size1, hidden_size2)
    w3, b3 = linear(ks[4], ks[5], hidden_size2, output_size)
    return w1, b1, w2, b2, w3, b3


if __name__ == "__main__":
    # Small shapes consistent with the module: Discriminator(32, 64, 32, 8)
    input_size, hidden_size1, hidden_size2, output_size = 32, 64, 32, 8

    key = jax.random.PRNGKey(0)
    k_x, k_p, k_big = jax.random.split(key, 3)

    w1, b1, w2, b2, w3, b3 = init_params(
        k_p, input_size, hidden_size1, hidden_size2, output_size
    )

    # Reference in plain JAX (same math, eval-mode dropout).
    def ref(xx):
        h = xx @ w1 + b1
        h = jnp.where(h > 0, h, 0.2 * h)
        h = h @ w2 + b2
        h = jnp.where(h > 0, h, 0.2 * h)
        h = h @ w3 + b3
        return jax.nn.sigmoid(h)

    # Small batch: single (ragged) grid step.
    x = jax.random.normal(k_x, (4, input_size), jnp.float32)
    y = jax.block_until_ready(discriminator_forward(x, w1, b1, w2, b2, w3, b3))
    assert y.shape == (4, output_size)
    assert jnp.allclose(y, ref(x), atol=2e-5, rtol=2e-5)

    # Non-aligned batch: >= 2 grid steps ("parallel" axis feeds both v7x TCs)
    # plus a ragged last block, with no wrapper-side pad or slice passes.
    x2 = jax.random.normal(k_big, (200, input_size), jnp.float32)
    y2 = jax.block_until_ready(discriminator_forward(x2, w1, b1, w2, b2, w3, b3))
    assert y2.shape == (200, output_size)
    assert jnp.allclose(y2, ref(x2), atol=2e-5, rtol=2e-5)

    print("KERNEL_OK")
</pallas_src>

<mosaic_0001>
module attributes {stable_mosaic.version = 11 : i64} {
  func.func @_disc_kernel(%arg0: i32, %arg1: memref<8x32xf32, #tpu.memory_space<vmem>>, %arg2: memref<32x64xf32, #tpu.memory_space<vmem>>, %arg3: memref<1x64xf32, #tpu.memory_space<vmem>>, %arg4: memref<64x32xf32, #tpu.memory_space<vmem>>, %arg5: memref<1x32xf32, #tpu.memory_space<vmem>>, %arg6: memref<32x8xf32, #tpu.memory_space<vmem>>, %arg7: memref<1x8xf32, #tpu.memory_space<vmem>>, %arg8: memref<8x8xf32, #tpu.memory_space<vmem>>) attributes {dimension_semantics = [#tpu.dimension_semantics<parallel>], iteration_bounds = array<i64: 1>, scalar_prefetch = 0 : i64, scratch_operands = 0 : i64, tpu.core_type = #tpu.core_type<tc>, window_params = [{transform_indices = @transform_0, window_bounds = array<i64: 8, 32>}, {pipeline_mode = #tpu.pipeline_mode<synchronous>, transform_indices = @transform_1, window_bounds = array<i64: 32, 64>}, {pipeline_mode = #tpu.pipeline_mode<synchronous>, transform_indices = @transform_2, window_bounds = array<i64: 1, 64>}, {pipeline_mode = #tpu.pipeline_mode<synchronous>, transform_indices = @transform_3, window_bounds = array<i64: 64, 32>}, {pipeline_mode = #tpu.pipeline_mode<synchronous>, transform_indices = @transform_4, window_bounds = array<i64: 1, 32>}, {pipeline_mode = #tpu.pipeline_mode<synchronous>, transform_indices = @transform_5, window_bounds = array<i64: 32, 8>}, {pipeline_mode = #tpu.pipeline_mode<synchronous>, transform_indices = @transform_6, window_bounds = array<i64: 1, 8>}, {transform_indices = @transform_7, window_bounds = array<i64: 8, 8>}]} {
    %c0 = arith.constant 0 : index
    %c0_0 = arith.constant 0 : index
    %0 = vector.load %arg1[%c0, %c0_0] : memref<8x32xf32, #tpu.memory_space<vmem>>, vector<8x32xf32>
    %c0_1 = arith.constant 0 : index
    %c0_2 = arith.constant 0 : index
    %1 = vector.load %arg2[%c0_1, %c0_2] : memref<32x64xf32, #tpu.memory_space<vmem>>, vector<32x64xf32>
    %cst = arith.constant dense<0.000000e+00> : vector<8x64xf32>
    %2 = tpu.matmul %0, %1, %cst {dimension_numbers = #tpu.dot_dimension_numbers<[1], [0], [0], [1], [0, 0, 1, 1], [], []>} : vector<8x32xf32>, vector<32x64xf32>, vector<8x64xf32> -> vector<8x64xf32>
    %c0_3 = arith.constant 0 : index
    %c0_4 = arith.constant 0 : index
    %3 = vector.load %arg3[%c0_3, %c0_4] : memref<1x64xf32, #tpu.memory_space<vmem>>, vector<1x64xf32>
    %4 = vector.broadcast %3 : vector<1x64xf32> to vector<8x64xf32>
    %5 = arith.addf %2, %4 : vector<8x64xf32>
    %cst_5 = arith.constant 0.000000e+00 : f32
    %6 = vector.broadcast %cst_5 : f32 to vector<8x64xf32>
    %7 = arith.cmpf ogt, %5, %6 : vector<8x64xf32>
    %cst_6 = arith.constant 2.000000e-01 : f32
    %8 = vector.broadcast %cst_6 : f32 to vector<8x64xf32>
    %9 = arith.mulf %8, %5 : vector<8x64xf32>
    %10 = arith.select %7, %5, %9 : vector<8x64xi1>, vector<8x64xf32>
    %c0_7 = arith.constant 0 : index
    %c0_8 = arith.constant 0 : index
    %11 = vector.load %arg4[%c0_7, %c0_8] : memref<64x32xf32, #tpu.memory_space<vmem>>, vector<64x32xf32>
    %cst_9 = arith.constant dense<0.000000e+00> : vector<8x32xf32>
    %12 = tpu.matmul %10, %11, %cst_9 {dimension_numbers = #tpu.dot_dimension_numbers<[1], [0], [0], [1], [0, 0, 1, 1], [], []>} : vector<8x64xf32>, vector<64x32xf32>, vector<8x32xf32> -> vector<8x32xf32>
    %c0_10 = arith.constant 0 : index
    %c0_11 = arith.constant 0 : index
    %13 = vector.load %arg5[%c0_10, %c0_11] : memref<1x32xf32, #tpu.memory_space<vmem>>, vector<1x32xf32>
    %14 = vector.broadcast %13 : vector<1x32xf32> to vector<8x32xf32>
    %15 = arith.addf %12, %14 : vector<8x32xf32>
    %cst_12 = arith.constant 0.000000e+00 : f32
    %16 = vector.broadcast %cst_12 : f32 to vector<8x32xf32>
    %17 = arith.cmpf ogt, %15, %16 : vector<8x32xf32>
    %cst_13 = arith.constant 2.000000e-01 : f32
    %18 = vector.broadcast %cst_13 : f32 to vector<8x32xf32>
    %19 = arith.mulf %18, %15 : vector<8x32xf32>
    %20 = arith.select %17, %15, %19 : vector<8x32xi1>, vector<8x32xf32>
    %c0_14 = arith.constant 0 : index
    %c0_15 = arith.constant 0 : index
    %21 = vector.load %arg6[%c0_14, %c0_15] : memref<32x8xf32, #tpu.memory_space<vmem>>, vector<32x8xf32>
    %cst_16 = arith.constant dense<0.000000e+00> : vector<8x8xf32>
    %22 = tpu.matmul %20, %21, %cst_16 {dimension_numbers = #tpu.dot_dimension_numbers<[1], [0], [0], [1], [0, 0, 1, 1], [], []>} : vector<8x32xf32>, vector<32x8xf32>, vector<8x8xf32> -> vector<8x8xf32>
    %c0_17 = arith.constant 0 : index
    %c0_18 = arith.constant 0 : index
    %23 = vector.load %arg7[%c0_17, %c0_18] : memref<1x8xf32, #tpu.memory_space<vmem>>, vector<1x8xf32>
    %24 = vector.broadcast %23 : vector<1x8xf32> to vector<8x8xf32>
    %25 = arith.addf %22, %24 : vector<8x8xf32>
    %26 = arith.negf %25 : vector<8x8xf32>
    %27 = math.exp %26 : vector<8x8xf32>
    %cst_19 = arith.constant 1.000000e+00 : f32
    %28 = vector.broadcast %cst_19 : f32 to vector<8x8xf32>
    %29 = arith.addf %28, %27 : vector<8x8xf32>
    %30 = arith.divf %28, %29 : vector<8x8xf32>
    %c0_20 = arith.constant 0 : index
    %c0_21 = arith.constant 0 : index
    %31 = vector.load %arg8[%c0_20, %c0_21] : memref<8x8xf32, #tpu.memory_space<vmem>>, vector<8x8xf32>
    tpu.vector_store %arg8[%c0_20, %c0_21], %30 {strides = array<i32>} : memref<8x8xf32, #tpu.memory_space<vmem>>, vector<8x8xf32>,
    return
  }
  func.func @transform_0(%arg0: i32) -> (i32, i32) {
    %c0_i32 = arith.constant 0 : i32
    %c0_i32_0 = arith.constant 0 : i32
    return %arg0, %c0_i32 : i32, i32
  }
  func.func @transform_1(%arg0: i32) -> (i32, i32) {
    %c0_i32 = arith.constant 0 : i32
    %c0_i32_0 = arith.constant 0 : i32
    %c0_i32_1 = arith.constant 0 : i32
    return %c0_i32, %c0_i32_0 : i32, i32
  }
  func.func @transform_2(%arg0: i32) -> (i32, i32) {
    %c0_i32 = arith.constant 0 : i32
    %c0_i32_0 = arith.constant 0 : i32
    %c0_i32_1 = arith.constant 0 : i32
    return %c0_i32, %c0_i32_0 : i32, i32
  }
  func.func @transform_3(%arg0: i32) -> (i32, i32) {
    %c0_i32 = arith.constant 0 : i32
    %c0_i32_0 = arith.constant 0 : i32
    %c0_i32_1 = arith.constant 0 : i32
    return %c0_i32, %c0_i32_0 : i32, i32
  }
  func.func @transform_4(%arg0: i32) -> (i32, i32) {
    %c0_i32 = arith.constant 0 : i32
    %c0_i32_0 = arith.constant 0 : i32
    %c0_i32_1 = arith.constant 0 : i32
    return %c0_i32, %c0_i32_0 : i32, i32
  }
  func.func @transform_5(%arg0: i32) -> (i32, i32) {
    %c0_i32 = arith.constant 0 : i32
    %c0_i32_0 = arith.constant 0 : i32
    %c0_i32_1 = arith.constant 0 : i32
    return %c0_i32, %c0_i32_0 : i32, i32
  }
  func.func @transform_6(%arg0: i32) -> (i32, i32) {
    %c0_i32 = arith.constant 0 : i32
    %c0_i32_0 = arith.constant 0 : i32
    %c0_i32_1 = arith.constant 0 : i32
    return %c0_i32, %c0_i32_0 : i32, i32
  }
  func.func @transform_7(%arg0: i32) -> (i32, i32) {
    %c0_i32 = arith.constant 0 : i32
    %c0_i32_0 = arith.constant 0 : i32
    return %arg0, %c0_i32 : i32, i32
  }
}

</mosaic_0001>

<llo_original>
// kernel: discriminator_forward.1
$region0: #{discriminator_forward.1}
  #allocation0 [shape = 'u32[]', space=smem, size = 0x4, offset = 0x4, fixed_abs, tag = 'smem constant byte address 0x4 - core index']
  #allocation1 [shape = 'u32[144,128]{1,0:T(1,128)}', space=vmem, size = 0x12000, scoped, tag = 'internal scratch']
  %s0 = inlined_call_operand.vmem [shape: f32[4,32], index: 0, kind: input, shape index: {}]
  %s1 = inlined_call_operand.vmem [shape: f32[32,64], index: 1, kind: input, shape index: {}]
  %s2 = inlined_call_operand.vmem [shape: f32[1,64], index: 2, kind: input, shape index: {}]
  %s3 = inlined_call_operand.vmem [shape: f32[64,32], index: 3, kind: input, shape index: {}]
  %s4 = inlined_call_operand.vmem [shape: f32[1,32], index: 4, kind: input, shape index: {}]
  %s5 = inlined_call_operand.vmem [shape: f32[32,8], index: 5, kind: input, shape index: {}]
  %s6 = inlined_call_operand.vmem [shape: f32[1,8], index: 6, kind: input, shape index: {}]
  %s7 = inlined_call_operand.hbm [shape: f32[4,8], index: 7, kind: output, shape index: {}]
  %s8 = sld [smem:[#allocation0]]
  $region38: #{discriminator_forward.1} parent=0
    _
  %s10 = ssub.s32 1, %s8
  %s11 = scalar_select 0, %s10, %s8
  $region1: #{discriminator_forward.1} parent=0
    #allocation2 [shape = 'u8[4096]{0}', space=vmem, size = 0x1000, scoped, tag = 'output window, operand 0, single buffered']
    #allocation3 [shape = 's32[1]{0}', space=sflag, size = 0x4, scoped, tag = 'scoped memory for discriminator_forward.1']
    %12 = vsyncpa [#allocation3], 0
    // Predicated region
    $region2: #{discriminator_forward.1} parent=1 // pred_check
      _
    $region3: #{discriminator_forward.1} parent=1 // pred_check_branch
      %14 = sbr.rel (0) target = $region5
    $region4: #{discriminator_forward.1} parent=1 // pred_region
      _
    $region5: #{discriminator_forward.1} parent=1 // pred_fallthru
      _
    // Predicated region
    $region6: #{discriminator_forward.1} parent=1 // pred_check
      _
    $region7: #{discriminator_forward.1} parent=1 // pred_check_branch
      %16 = sbr.rel (0) target = $region9
    $region8: #{discriminator_forward.1} parent=1 // pred_region
      _
    $region9: #{discriminator_forward.1} parent=1 // pred_fallthru
      _
    // Predicated region
    $region10: #{discriminator_forward.1} parent=1 // pred_check
      _
    $region11: #{discriminator_forward.1} parent=1 // pred_check_branch
      %18 = sbr.rel (0) target = $region13
    $region12: #{discriminator_forward.1} parent=1 // pred_region
      _
    $region13: #{discriminator_forward.1} parent=1 // pred_fallthru
      _
    // Predicated region
    $region14: #{discriminator_forward.1} parent=1 // pred_check
      _
    $region15: #{discriminator_forward.1} parent=1 // pred_check_branch
      %20 = sbr.rel (0) target = $region17
    $region16: #{discriminator_forward.1} parent=1 // pred_region
      _
    $region17: #{discriminator_forward.1} parent=1 // pred_fallthru
      _
    // Predicated region
    $region18: #{discriminator_forward.1} parent=1 // pred_check
      _
    $region19: #{discriminator_forward.1} parent=1 // pred_check_branch
      %22 = sbr.rel (0) target = $region21
    $region20: #{discriminator_forward.1} parent=1 // pred_region
      _
    $region21: #{discriminator_forward.1} parent=1 // pred_fallthru
      _
    // Predicated region
    $region22: #{discriminator_forward.1} parent=1 // pred_check
      _
    $region23: #{discriminator_forward.1} parent=1 // pred_check_branch
      %24 = sbr.rel (0) target = $region25
    $region24: #{discriminator_forward.1} parent=1 // pred_region
      _
    $region25: #{discriminator_forward.1} parent=1 // pred_fallthru
      _
    // Predicated region
    $region26: #{discriminator_forward.1} parent=1 // pred_check
      _
    $region27: #{discriminator_forward.1} parent=1 // pred_check_branch
      %26 = sbr.rel (0) target = $region29
    $region28: #{discriminator_forward.1} parent=1 // pred_region
      _
    $region29: #{discriminator_forward.1} parent=1 // pred_fallthru
      _
    %v27 = vld [vmem:[%s0] sm:$0xff]
    %v28 = vld [vmem:[%s1] sm:$0xff]
    %v29 = vld [vmem:[%s1 + $0x8] sm:$0xff]
    %v30 = vld [vmem:[%s1 + $0x10] sm:$0xff]
    %v31 = vld [vmem:[%s1 + $0x18] sm:$0xff]
    %v32 = vld [vmem:[%s2] sm:$0x1]
    %v34 = vlaneseq
    %v35 = vshrl.u32 %v34, 7
    %v36 = vsub.s32 0, %v35
    %v37 = vrot.slane %v32, %v36
    %vm39 = vcmask 261120
    %v41 = vsel %vm39, %v27, 0
    %43 = vmatprep.subr.mxu0 0.0
    %44 = vmatpush1.msra.mxu0 %v28
    %45 = vmatprep.subr.mxu0 0.0
    %46 = vmatpush1.msra.mxu0 %v29
    %47 = vmatprep.subr.mxu0 0.0
    %48 = vmatpush1.msra.mxu0 %v30
    %49 = vmatprep.subr.mxu0 0.0
    %50 = vmatpush1.msra.mxu0 %v31
    %51 = vmatprep.subr.mxu0 0.0
    %52 = vmatpush1.msra.mxu0 0.0
    %53 = vmatprep.subr.mxu0 0.0
    %54 = vmatpush1.msra.mxu0 0.0
    %55 = vmatprep.subr.mxu0 0.0
    %56 = vmatpush1.msra.mxu0 0.0
    %57 = vmatprep.subr.mxu0 0.0
    %58 = vmatpush1.msra.mxu0 0.0
    %59 = vmatprep.subr.mxu0 0.0
    %60 = vmatpush1.msra.mxu0 0.0
    %61 = vmatprep.subr.mxu0 0.0
    %62 = vmatpush1.msra.mxu0 0.0
    %63 = vmatprep.subr.mxu0 0.0
    %64 = vmatpush1.msra.mxu0 0.0
    %65 = vmatprep.subr.mxu0 0.0
    %66 = vmatpush1.msra.mxu0 0.0
    %67 = vmatprep.subr.mxu0 0.0
    %68 = vmatpush1.msra.mxu0 0.0
    %69 = vmatprep.subr.mxu0 0.0
    %70 = vmatpush1.msra.mxu0 0.0
    %71 = vmatprep.subr.mxu0 0.0
    %72 = vmatpush1.msra.mxu0 0.0
    %73 = vmatprep.subr.mxu0 0.0
    %74 = vmatpush1.msra.mxu0 0.0
    %75 = vmatprep.subr.mxu0 0.0
    %76 = vmatpush1.msra.mxu0 0.0
    %77 = vmatprep.subr.mxu0 0.0
    %78 = vmatpush1.msra.mxu0 0.0
    %79 = vmatprep.subr.mxu0 0.0
    %80 = vmatpush1.msra.mxu0 0.0
    %81 = vmatprep.subr.mxu0 0.0
    %82 = vmatpush1.msra.mxu0 0.0
    %83 = vmatprep.subr.mxu0 0.0
    %84 = vmatpush1.msra.mxu0 0.0
    %85 = vmatprep.subr.mxu0 0.0
    %86 = vmatpush1.msra.mxu0 0.0
    %87 = vmatprep.subr.mxu0 0.0
    %88 = vmatpush1.msra.mxu0 0.0
    %89 = vmatprep.subr.mxu0 0.0
    %90 = vmatpush1.msra.mxu0 0.0
    %91 = vmatprep.subr.mxu0 0.0
    %92 = vmatpush1.msra.mxu0 0.0
    %93 = vmatprep.subr.mxu0 0.0
    %94 = vmatpush1.msra.mxu0 0.0
    %95 = vmatprep.subr.mxu0 0.0
    %96 = vmatpush1.msra.mxu0 0.0
    %97 = vmatprep.subr.mxu0 0.0
    %98 = vmatpush1.msra.mxu0 0.0
    %99 = vmatprep.subr.mxu0 0.0
    %100 = vmatpush1.msra.mxu0 0.0
    %101 = vmatprep.subr.mxu0 0.0
    %102 = vmatpush1.msra.mxu0 0.0
    %103 = vmatprep.subr.mxu0 0.0
    %104 = vmatpush1.msra.mxu0 0.0
    %105 = vmatprep.subr.mxu0 0.0
    %106 = vmatpush1.msra.mxu0 0.0
    %107 = vmatprep.mubr.f32.mxu0 0.0
    %108 = vmatmul.mubr.f32.gmra.mrb[0].mxu0 %v41
    %v109 = vpop.f32.mrb[0].mxu0
    %v110 = vadd.f32 %v37, %v109
    %v111 = vpop.f32.mrb[0].mxu0
    %112 = vdwg.mxu0
    %vm113 = vcmp.gt.f32.partialorder %v110, 0.0
    %v114 = vmul.f32 %v110, 0.2
    %v115 = vsel %vm113, %v110, %v114
    %v116 = vld [vmem:[%s3] sm:$0xff]
    %v117 = vld [vmem:[%s3 + $0x8] sm:$0xff]
    %v118 = vld [vmem:[%s3 + $0x10] sm:$0xff]
    %v119 = vld [vmem:[%s3 + $0x18] sm:$0xff]
    %v120 = vld [vmem:[%s3 + $0x20] sm:$0xff]
    %v121 = vld [vmem:[%s3 + $0x28] sm:$0xff]
    %v122 = vld [vmem:[%s3 + $0x30] sm:$0xff]
    %v123 = vld [vmem:[%s3 + $0x38] sm:$0xff]
    %v124 = vld [vmem:[%s4] sm:$0x1]
    %v126 = vlaneseq
    %v127 = vshrl.u32 %v126, 7
    %v128 = vsub.s32 0, %v127
    %v129 = vrot.slane %v124, %v128
    %vm131 = vcmask 523264
    %v133 = vsel %vm131, %v115, 0
    %135 = vmatprep.subr.mxu0 0.0
    %136 = vmatpush1.msra.mxu0 %v116
    %137 = vmatprep.subr.mxu0 0.0
    %138 = vmatpush1.msra.mxu0 %v117
    %139 = vmatprep.subr.mxu0 0.0
    %140 = vmatpush1.msra.mxu0 %v118
    %141 = vmatprep.subr.mxu0 0.0
    %142 = vmatpush1.msra.mxu0 %v119
    %143 = vmatprep.subr.mxu0 0.0
    %144 = vmatpush1.msra.mxu0 %v120
    %145 = vmatprep.subr.mxu0 0.0
    %146 = vmatpush1.msra.mxu0 %v121
    %147 = vmatprep.subr.mxu0 0.0
    %148 = vmatpush1.msra.mxu0 %v122
    %149 = vmatprep.subr.mxu0 0.0
    %150 = vmatpush1.msra.mxu0 %v123
    %151 = vmatprep.subr.mxu0 0.0
    %152 = vmatpush1.msra.mxu0 0.0
    %153 = vmatprep.subr.mxu0 0.0
    %154 = vmatpush1.msra.mxu0 0.0
    %155 = vmatprep.subr.mxu0 0.0
    %156 = vmatpush1.msra.mxu0 0.0
    %157 = vmatprep.subr.mxu0 0.0
    %158 = vmatpush1.msra.mxu0 0.0
    %159 = vmatprep.subr.mxu0 0.0
    %160 = vmatpush1.msra.mxu0 0.0
    %161 = vmatprep.subr.mxu0 0.0
    %162 = vmatpush1.msra.mxu0 0.0
    %163 = vmatprep.subr.mxu0 0.0
    %164 = vmatpush1.msra.mxu0 0.0
    %165 = vmatprep.subr.mxu0 0.0
    %166 = vmatpush1.msra.mxu0 0.0
    %167 = vmatprep.subr.mxu0 0.0
    %168 = vmatpush1.msra.mxu0 0.0
    %169 = vmatprep.subr.mxu0 0.0
    %170 = vmatpush1.msra.mxu0 0.0
    %171 = vmatprep.subr.mxu0 0.0
    %172 = vmatpush1.msra.mxu0 0.0
    %173 = vmatprep.subr.mxu0 0.0
    %174 = vmatpush1.msra.mxu0 0.0
    %175 = vmatprep.subr.mxu0 0.0
    %176 = vmatpush1.msra.mxu0 0.0
    %177 = vmatprep.subr.mxu0 0.0
    %178 = vmatpush1.msra.mxu0 0.0
    %179 = vmatprep.subr.mxu0 0.0
    %180 = vmatpush1.msra.mxu0 0.0
    %181 = vmatprep.subr.mxu0 0.0
    %182 = vmatpush1.msra.mxu0 0.0
    %183 = vmatprep.subr.mxu0 0.0
    %184 = vmatpush1.msra.mxu0 0.0
    %185 = vmatprep.subr.mxu0 0.0
    %186 = vmatpush1.msra.mxu0 0.0
    %187 = vmatprep.subr.mxu0 0.0
    %188 = vmatpush1.msra.mxu0 0.0
    %189 = vmatprep.subr.mxu0 0.0
    %190 = vmatpush1.msra.mxu0 0.0
    %191 = vmatprep.subr.mxu0 0.0
    %192 = vmatpush1.msra.mxu0 0.0
    %193 = vmatprep.subr.mxu0 0.0
    %194 = vmatpush1.msra.mxu0 0.0
    %195 = vmatprep.subr.mxu0 0.0
    %196 = vmatpush1.msra.mxu0 0.0
    %197 = vmatprep.subr.mxu0 0.0
    %198 = vmatpush1.msra.mxu0 0.0
    %199 = vmatprep.mubr.f32.mxu0 0.0
    %200 = vmatmul.mubr.f32.gmra.mrb[0].mxu0 %v133
    %v201 = vpop.f32.mrb[0].mxu0
    %v202 = vadd.f32 %v129, %v201
    %v203 = vpop.f32.mrb[0].mxu0
    %204 = vdwg.mxu0
    %vm205 = vcmp.gt.f32.partialorder %v202, 0.0
    %v206 = vmul.f32 %v202, 0.2
    %v207 = vsel %vm205, %v202, %v206
    %v208 = vld [vmem:[%s5] sm:$0xff]
    %v209 = vld [vmem:[%s5 + $0x8] sm:$0xff]
    %v210 = vld [vmem:[%s5 + $0x10] sm:$0xff]
    %v211 = vld [vmem:[%s5 + $0x18] sm:$0xff]
    %v212 = vld [vmem:[%s6] sm:$0x1]
    %v214 = vlaneseq
    %v215 = vshrl.u32 %v214, 7
    %v216 = vsub.s32 0, %v215
    %v217 = vrot.slane %v212, %v216
    %v220 = vsel %vm39, %v207, 0
    %222 = vmatprep.subr.mxu0 0.0
    %223 = vmatpush1.msra.mxu0 %v208
    %224 = vmatprep.subr.mxu0 0.0
    %225 = vmatpush1.msra.mxu0 %v209
    %226 = vmatprep.subr.mxu0 0.0
    %227 = vmatpush1.msra.mxu0 %v210
    %228 = vmatprep.subr.mxu0 0.0
    %229 = vmatpush1.msra.mxu0 %v211
    %230 = vmatprep.subr.mxu0 0.0
    %231 = vmatpush1.msra.mxu0 0.0
    %232 = vmatprep.subr.mxu0 0.0
    %233 = vmatpush1.msra.mxu0 0.0
    %234 = vmatprep.subr.mxu0 0.0
    %235 = vmatpush1.msra.mxu0 0.0
    %236 = vmatprep.subr.mxu0 0.0
    %237 = vmatpush1.msra.mxu0 0.0
    %238 = vmatprep.subr.mxu0 0.0
    %239 = vmatpush1.msra.mxu0 0.0
    %240 = vmatprep.subr.mxu0 0.0
    %241 = vmatpush1.msra.mxu0 0.0
    %242 = vmatprep.subr.mxu0 0.0
    %243 = vmatpush1.msra.mxu0 0.0
    %244 = vmatprep.subr.mxu0 0.0
    %245 = vmatpush1.msra.mxu0 0.0
    %246 = vmatprep.subr.mxu0 0.0
    %247 = vmatpush1.msra.mxu0 0.0
    %248 = vmatprep.subr.mxu0 0.0
    %249 = vmatpush1.msra.mxu0 0.0
    %250 = vmatprep.subr.mxu0 0.0
    %251 = vmatpush1.msra.mxu0 0.0
    %252 = vmatprep.subr.mxu0 0.0
    %253 = vmatpush1.msra.mxu0 0.0
    %254 = vmatprep.subr.mxu0 0.0
    %255 = vmatpush1.msra.mxu0 0.0
    %256 = vmatprep.subr.mxu0 0.0
    %257 = vmatpush1.msra.mxu0 0.0
    %258 = vmatprep.subr.mxu0 0.0
    %259 = vmatpush1.msra.mxu0 0.0
    %260 = vmatprep.subr.mxu0 0.0
    %261 = vmatpush1.msra.mxu0 0.0
    %262 = vmatprep.subr.mxu0 0.0
    %263 = vmatpush1.msra.mxu0 0.0
    %264 = vmatprep.subr.mxu0 0.0
    %265 = vmatpush1.msra.mxu0 0.0
    %266 = vmatprep.subr.mxu0 0.0
    %267 = vmatpush1.msra.mxu0 0.0
    %268 = vmatprep.subr.mxu0 0.0
    %269 = vmatpush1.msra.mxu0 0.0
    %270 = vmatprep.subr.mxu0 0.0
    %271 = vmatpush1.msra.mxu0 0.0
    %272 = vmatprep.subr.mxu0 0.0
    %273 = vmatpush1.msra.mxu0 0.0
    %274 = vmatprep.subr.mxu0 0.0
    %275 = vmatpush1.msra.mxu0 0.0
    %276 = vmatprep.subr.mxu0 0.0
    %277 = vmatpush1.msra.mxu0 0.0
    %278 = vmatprep.subr.mxu0 0.0
    %279 = vmatpush1.msra.mxu0 0.0
    %280 = vmatprep.subr.mxu0 0.0
    %281 = vmatpush1.msra.mxu0 0.0
    %282 = vmatprep.subr.mxu0 0.0
    %283 = vmatpush1.msra.mxu0 0.0
    %284 = vmatprep.subr.mxu0 0.0
    %285 = vmatpush1.msra.mxu0 0.0
    %286 = vmatprep.mubr.f32.mxu0 0.0
    %287 = vmatmul.mubr.f32.gmra.mrb[0].mxu0 %v220
    %v288 = vpop.f32.mrb[0].mxu0
    %v289 = vadd.f32 %v217, %v288
    %v290 = vpop.f32.mrb[0].mxu0
    %291 = vdwg.mxu0
    %v292 = vxor.u32 %v289, 2147483648
    %v293 = vmul.f32 %v292, 1.442695
    %v294 = vpow.pop %v293
    %v295 = vadd.f32 %v294, 1.0
    %v296 = vrcp.pop %v295
    %v297 = vmul.f32 1.0, %v296
    %vm298 = vcmask 64512
    %299 = vst.msk [vmem:[#allocation2] sm:$0xff] %vm298, %v297
    // Predicated region
    $region30: #{discriminator_forward.1} parent=1 // pred_check
      _
    $region31: #{discriminator_forward.1} parent=1 // pred_check_branch
      %301 = sbr.rel (0) target = $region33
    $region32: #{discriminator_forward.1} parent=1 // pred_region
      %s303 = ssub.s32 128, 64
      %304 = vsyncadd [#allocation3], %s303
      %s305 = sshll.u32 [#allocation2], 4
      %s306 = int_to_ptr.vmem [resolvable:$true] %s305
      %311 = dma.vmem_to_hbm [thread:$0]  %s306, 64, %s7, [#allocation3], 64, 64, 4
    $region33: #{discriminator_forward.1} parent=1 // pred_fallthru
      _
    // Predicated region
    $region34: #{discriminator_forward.1} parent=1 // pred_check
      _
    $region35: #{discriminator_forward.1} parent=1 // pred_check_branch
      %313 = sbr.rel (0) target = $region37
    $region36: #{discriminator_forward.1} parent=1 // pred_region
      %314 = dma.done [#allocation3], 128
    $region37: #{discriminator_forward.1} parent=1 // pred_fallthru
      _
    %315 = vsyncpa [#allocation3], 1

</llo_original>
